<compile_context>
chip_gen: v5e
topology: v5e:2x2
jax: 0.10.0
libtpu: 0.0.40
codegen_flags: <defaults>
</compile_context>

<pallas_src>
import jax
import jax.numpy as jnp
from jax.experimental import pallas as pl
from jax.experimental.pallas import tpu as pltpu


# ---------------------------------------------------------------------------
# Kernels
# ---------------------------------------------------------------------------
def _unembed_kernel_2d(x_ref, o_ref):
    # x_ref: (TL, C) VMEM tile, o_ref: (C, TL) VMEM tile (batch dim squeezed).
    # Output last dim TL is lane-dense (multiple of 128), so stores are
    # unmasked full-width vst.
    o_ref[...] = x_ref[...].T


def _unembed_kernel_batched(x_ref, o_ref):
    # x_ref: (TB, L, C), o_ref: (TB, C, L) — whole-L per batch element.
    o_ref[...] = jnp.swapaxes(x_ref[...], 1, 2)


# ---------------------------------------------------------------------------
# Tile-size policy
# ---------------------------------------------------------------------------
def _vmem_capacity_bytes() -> int:
    """Physical per-core VMEM; conservative fallback if the query fails."""
    try:
        info = pltpu.get_tpu_info()
        cap = getattr(info, "vmem_capacity_bytes", None)
        if cap:
            return int(cap)
    except Exception:
        pass
    return 64 << 20  # v7x per-core VMEM (smallest current generation)


def _pick_tiles(B, L, C, itemsize, budget_bytes):
    """Pick (TB, TL) so that 4 * TB * TL * C * itemsize <= budget_bytes.

    Returns TB > 1 only when TL == L (whole-sequence blocks).  Prefers tile
    extents that divide the array extents to keep every store unmasked.
    """
    # Live footprint ~= 2 double-buffered in tiles + 2 double-buffered out tiles.
    max_tile_elems = budget_bytes // (4 * itemsize)
    # Keep >= ~4 grid steps so in/out DMAs pipeline, but never below one
    # lane-dense 128-row tile.
    total_elems = B * L * C
    max_tile_elems = min(max_tile_elems, max(total_elems // 4, 128 * C))
    max_tile_elems = max(max_tile_elems, 128 * C)

    max_tl_whole = max_tile_elems // C

    if L <= max_tl_whole:
        # Whole-L per batch element fits; tile over batch to reach the budget.
        tb = max(1, min(B, max_tile_elems // (L * C)))
        while tb > 1 and B % tb != 0:   # prefer TB that divides B (no ragged tile)
            tb -= 1
        return tb, L

    # Sequence-tiled path: largest lane-dense (128-multiple) TL within budget
    # that divides L.
    cap_tl = max((max_tl_whole // 128) * 128, 128)
    for tl in range(cap_tl, 0, -128):
        if L % tl == 0:
            return 1, tl
    # Ragged fallback: last tile per batch is partial; Pallas masks OOB stores.
    return 1, cap_tl


# ---------------------------------------------------------------------------
# Public op
# ---------------------------------------------------------------------------
def patch_unembed(x, x_size, embed_dim, *, force_pallas=False,
                  small_bytes=4 << 20, max_live_bytes=None):
    """PatchUnEmbed forward: x (B, L, C) -> (B, C, H, W); L == H*W, C == embed_dim."""
    B, L, C = x.shape
    H, W = x_size
    assert L == H * W and C == embed_dim

    itemsize = jnp.dtype(x.dtype).itemsize
    total_bytes = x.size * itemsize

    # Fast path: for small tensors a standalone pallas_call is pure launch /
    # per-step overhead; a plain swapaxes lets XLA fold the transpose into
    # neighbouring ops.
    if not force_pallas and total_bytes < small_bytes:
        return jnp.swapaxes(x, 1, 2).reshape(B, C, H, W)

    vmem_cap = _vmem_capacity_bytes()
    budget = max_live_bytes if max_live_bytes is not None else vmem_cap // 2
    vmem_limit = int(min(vmem_cap, budget + (16 << 20)))

    tb, tl = _pick_tiles(B, L, C, itemsize, budget)

    if tl == L:
        # Whole-L blocks, tiled over batch.
        grid = (pl.cdiv(B, tb),)
        kernel = _unembed_kernel_batched
        in_specs = [pl.BlockSpec((tb, L, C), lambda b: (b, 0, 0))]
        out_specs = pl.BlockSpec((tb, C, L), lambda b: (b, 0, 0))
        dims = ("parallel",)
    else:
        # Sequence-tiled blocks, batch dim squeezed -> clean 2-D XLU transpose.
        grid = (B, pl.cdiv(L, tl))
        kernel = _unembed_kernel_2d
        in_specs = [pl.BlockSpec((None, tl, C), lambda b, l: (b, l, 0))]
        out_specs = pl.BlockSpec((None, C, tl), lambda b, l: (b, 0, l))
        dims = ("parallel", "parallel")

    out_bcl = pl.pallas_call(
        kernel,
        out_shape=jax.ShapeDtypeStruct((B, C, L), x.dtype),
        grid_spec=pltpu.PrefetchScalarGridSpec(
            num_scalar_prefetch=0,
            grid=grid,
            in_specs=in_specs,
            out_specs=out_specs,
        ),
        compiler_params=pltpu.CompilerParams(
            dimension_semantics=dims,
            vmem_limit_bytes=vmem_limit,
        ),
        # Pure data movement: help XLA's scheduler overlap neighbours.
        cost_estimate=pl.CostEstimate(
            flops=0, transcendentals=0,
            bytes_accessed=2 * B * L * C * itemsize),
    )(x)

    # Free row-major view, identical to PyTorch's .contiguous().view(B, C, H, W).
    return out_bcl.reshape(B, C, H, W)


# ---------------------------------------------------------------------------
# Tests
# ---------------------------------------------------------------------------
if __name__ == "__main__":
    def ref(x, H, W):
        B, L, C = x.shape
        return jnp.swapaxes(x, 1, 2).reshape(B, C, H, W)

    # Case 1: whole-L, batch-tiled path (TB=2). B=8, H=W=8 -> L=64, C=32.
    B, H, W, C = 8, 8, 8, 32
    L = H * W
    x = jax.random.normal(jax.random.PRNGKey(0), (B, L, C), dtype=jnp.float32)
    out = jax.block_until_ready(patch_unembed(x, (H, W), C, force_pallas=True))
    assert out.shape == (B, C, H, W)
    assert jnp.allclose(out, ref(x, H, W))

    # Case 2: L-tiled path (small forced budget -> TL=256, 4 tiles).
    B2, H2, W2, C2 = 1, 32, 32, 32
    L2 = H2 * W2
    x2 = jax.random.normal(jax.random.PRNGKey(1), (B2, L2, C2), dtype=jnp.float32)
    out2 = jax.block_until_ready(
        patch_unembed(x2, (H2, W2), C2, force_pallas=True,
                      max_live_bytes=256 * 1024))
    assert out2.shape == (B2, C2, H2, W2)
    assert jnp.allclose(out2, ref(x2, H2, W2))

    # Case 3: ragged L (no 128-multiple divides L=1000) -> masked last tile.
    B3, H3, W3, C3 = 1, 25, 40, 32
    L3 = H3 * W3
    x3 = jax.random.normal(jax.random.PRNGKey(2), (B3, L3, C3), dtype=jnp.float32)
    out3 = jax.block_until_ready(
        patch_unembed(x3, (H3, W3), C3, force_pallas=True,
                      max_live_bytes=256 * 1024))
    assert out3.shape == (B3, C3, H3, W3)
    assert jnp.allclose(out3, ref(x3, H3, W3))

    # Case 4: tiny-tensor fast path (bypasses the kernel entirely).
    out4 = jax.block_until_ready(patch_unembed(x, (H, W), C))
    assert jnp.allclose(out4, ref(x, H, W))

    print("KERNEL_OK")
</pallas_src>

<mosaic_0001>
module attributes {stable_mosaic.version = 11 : i64} {
  func.func @_unembed_kernel_batched(%arg0: i32, %arg1: memref<2x64x32xf32, #tpu.memory_space<vmem>>, %arg2: memref<2x32x64xf32, #tpu.memory_space<vmem>>) attributes {dimension_semantics = [#tpu.dimension_semantics<parallel>], iteration_bounds = array<i64: 4>, scalar_prefetch = 0 : i64, scratch_operands = 0 : i64, tpu.core_type = #tpu.core_type<tc>, window_params = [{transform_indices = @transform_0, window_bounds = array<i64: 2, 64, 32>}, {transform_indices = @transform_1, window_bounds = array<i64: 2, 32, 64>}]} {
    %c0 = arith.constant 0 : index
    %c0_0 = arith.constant 0 : index
    %c0_1 = arith.constant 0 : index
    %0 = vector.load %arg1[%c0, %c0_0, %c0_1] : memref<2x64x32xf32, #tpu.memory_space<vmem>>, vector<2x64x32xf32>
    %1 = tpu.transpose %0, [0, 2, 1] : vector<2x64x32xf32> -> vector<2x32x64xf32>
    %c0_2 = arith.constant 0 : index
    %c0_3 = arith.constant 0 : index
    %c0_4 = arith.constant 0 : index
    %2 = vector.load %arg2[%c0_2, %c0_3, %c0_4] : memref<2x32x64xf32, #tpu.memory_space<vmem>>, vector<2x32x64xf32>
    tpu.vector_store %arg2[%c0_2, %c0_3, %c0_4], %1 {strides = array<i32>} : memref<2x32x64xf32, #tpu.memory_space<vmem>>, vector<2x32x64xf32>,
    return
  }
  func.func @transform_0(%arg0: i32) -> (i32, i32, i32) {
    %c0_i32 = arith.constant 0 : i32
    %c0_i32_0 = arith.constant 0 : i32
    %c0_i32_1 = arith.constant 0 : i32
    return %arg0, %c0_i32, %c0_i32_0 : i32, i32, i32
  }
  func.func @transform_1(%arg0: i32) -> (i32, i32, i32) {
    %c0_i32 = arith.constant 0 : i32
    %c0_i32_0 = arith.constant 0 : i32
    %c0_i32_1 = arith.constant 0 : i32
    return %arg0, %c0_i32, %c0_i32_0 : i32, i32, i32
  }
}

</mosaic_0001>

<llo_original>
// kernel: tpu_custom_call.1
$region0: #{tpu_custom_call.1}
  #allocation0 [shape = 'u32[]', space=smem, size = 0x4, offset = 0x4, fixed_abs, tag = 'smem constant byte address 0x4 - core index']
  #allocation1 [shape = 'u32[72,128]{1,0:T(1,128)}', space=vmem, size = 0x9000, scoped, tag = 'internal scratch']
  %s0 = inlined_call_operand.vmem [shape: f32[8,64,32], index: 0, kind: input, shape index: {}]
  %s1 = inlined_call_operand.hbm [shape: f32[8,32,64], index: 1, kind: output, shape index: {}]
  %s2 = sld [smem:[#allocation0]]
  $region37: #{tpu_custom_call.1} parent=0
    _
  %s4 = ssub.s32 1, %s2
  %s5 = scalar_select 0, %s4, %s2
  $region1: #{tpu_custom_call.1} parent=0
    #allocation2 [shape = 'u8[65536]{0}', space=vmem, size = 0x10000, scoped, tag = 'output window, operand 0']
    #allocation3 [shape = 's32[2]{0}', space=sflag, size = 0x8, scoped, tag = 'scoped memory for tpu_custom_call.1']
    %6 = vsyncpa [#allocation3], 0
    %s7 = scalar_lea.sflag [#allocation3], 1
    %8 = vsyncpa %s7, 0
    loop: start=0, step=1, limit=6
    $region2: #{tpu_custom_call.1} parent=1 // loop_pre_header
      _
    $region3: #{tpu_custom_call.1} parent=1 // loop_header
      %s10 = sphi 0, %s14
      %p11 = scmp.ge.s32.totalorder %s10, 6
      %s20 = sphi 0, %s22
      %s23 = sphi 0, %s20
      %s24 = sphi 0, %s23
      %s40 = sphi 0, %s24
      %s46 = sphi 0, %s48
      %s49 = sphi 0, %s46
      %s50 = sphi 0, %s49
      %s66 = sphi 0, %s50
    $region4: #{tpu_custom_call.1} parent=1 // loop_header_branch
      %13 = sbr.rel (%p11) target = $region8
    $region5: #{tpu_custom_call.1} parent=1 // loop_body
      %s15 = ssub.s32 %s10, 1
      %s16 = ssub.s32 %s10, 2
      %s17 = sadd.s32 %s10, 1
      %s18 = ssub.s32 %s10, %s17
      %p19 = scmp.eq.s32.totalorder %s18, 0
      %s21 = sadd.s32 %s20, 1
      %s22 = scalar_select %p19, %s20, %s21
      %p25 = pneg %p19
      %p26 = scmp.eq.s32.totalorder %s10, 3
      %p27 = por %p25, %p26
      %p28 = scmp.ne.s32.totalorder %s20, %s23
      %p29 = scmp.eq.s32.totalorder %s10, 0
      %p30 = por %p28, %p29
      %p31 = scmp.ne.s32.totalorder %s20, %s23
      %p32 = scmp.eq.s32.totalorder %s15, 3
      %p33 = por %p31, %p32
      %p34 = scmp.ne.s32.totalorder %s23, %s24
      %p35 = scmp.eq.s32.totalorder %s15, 0
      %p36 = por %p34, %p35
      %p37 = scmp.ne.s32.totalorder %s23, %s24
      %p38 = scmp.eq.s32.totalorder %s16, 3
      %p39 = por %p37, %p38
      %p41 = scmp.ne.s32.totalorder %s24, %s40
      %p42 = scmp.eq.s32.totalorder %s16, 0
      %p43 = por %p41, %p42
      %s44 = ssub.s32 %s10, %s17
      %p45 = scmp.eq.s32.totalorder %s44, 0
      %s47 = sadd.s32 %s46, 1
      %s48 = scalar_select %p45, %s46, %s47
      %p51 = pneg %p45
      %p52 = scmp.eq.s32.totalorder %s10, 3
      %p53 = por %p51, %p52
      %p54 = scmp.ne.s32.totalorder %s46, %s49
      %p55 = scmp.eq.s32.totalorder %s10, 0
      %p56 = por %p54, %p55
      %p57 = scmp.ne.s32.totalorder %s46, %s49
      %p58 = scmp.eq.s32.totalorder %s15, 3
      %p59 = por %p57, %p58
      %p60 = scmp.ne.s32.totalorder %s49, %s50
      %p61 = scmp.eq.s32.totalorder %s15, 0
      %p62 = por %p60, %p61
      %p63 = scmp.ne.s32.totalorder %s49, %s50
      %p64 = scmp.eq.s32.totalorder %s16, 3
      %p65 = por %p63, %p64
      %p67 = scmp.ne.s32.totalorder %s50, %s66
      %p68 = scmp.eq.s32.totalorder %s16, 0
      %p69 = por %p67, %p68
      %p70 = scmp.le.s32.totalorder 1, %s10
      %p71 = scmp.lt.s32.totalorder %s10, 5
      %p72 = pnand %p70, %p71
      %p73 = pneg %p72
      // Predicated region
      $region9: #{tpu_custom_call.1} parent=5 // pred_check
        _
      $region10: #{tpu_custom_call.1} parent=5 // pred_check_branch
        %75 = sbr.rel (%p72) target = $region12
      $region11: #{tpu_custom_call.1} parent=5 // pred_region
        %s76 = ssub.s32 %s10, 1
      $region12: #{tpu_custom_call.1} parent=5 // pred_fallthru
        _
      %p77 = scmp.lt.s32.totalorder %s10, 4
      // Predicated region
      $region13: #{tpu_custom_call.1} parent=5 // pred_check
        %p78 = pneg %p77
      $region14: #{tpu_custom_call.1} parent=5 // pred_check_branch
        %80 = sbr.rel (%p78) target = $region16
      $region15: #{tpu_custom_call.1} parent=5 // pred_region
        // Predicated region
        $region17: #{tpu_custom_call.1} parent=15 // pred_check
          %p81 = pneg %p30
        $region18: #{tpu_custom_call.1} parent=15 // pred_check_branch
          %83 = sbr.rel (%p81) target = $region20
        $region19: #{tpu_custom_call.1} parent=15 // pred_region
          %s84 = smul.u32 2, %s10
          %p85 = scmp.lt.s32.totalorder %s84, 7
          %s86 = scalar_select %p85, %s84, 7
          %s87 = smul.addr %s86, 8
          %s88 = smul.addr %s87, 8
          %s89 = scalar_lea.vmem %s0, %s88
          %s90 = smul.u32 2, %s10
        $region20: #{tpu_custom_call.1} parent=15 // pred_fallthru
          _
      $region16: #{tpu_custom_call.1} parent=5 // pred_fallthru
        _
      %p91 = scmp.le.s32.totalorder 1, %s10
      %p92 = scmp.lt.s32.totalorder %s10, 5
      %p93 = pnand %p91, %p92
      %p94 = pneg %p93
      // Predicated region
      $region21: #{tpu_custom_call.1} parent=5 // pred_check
        _
      $region22: #{tpu_custom_call.1} parent=5 // pred_check_branch
        %96 = sbr.rel (%p93) target = $region24
      $region23: #{tpu_custom_call.1} parent=5 // pred_region
        %s97 = ssub.s32 %s10, 1
        %s98 = smul.u32 2, %s15
        %p99 = scmp.lt.s32.totalorder %s98, 7
        %s100 = scalar_select %p99, %s98, 7
        %s101 = smul.addr %s100, 8
        %s102 = smul.addr %s101, 8
        %s103 = scalar_lea.vmem %s0, %s102
        %p104 = pneg %p36
        %p105 = pneg %p33
        %p106 = pneg %p62
        %p107 = pneg %p59
        %s108 = sand.u32 %s49, 1
        %s109 = scalar_lea.sflag [#allocation3], %s108
        %s110 = sand.u32 %s49, 1
        %s111 = smul.addr %s110, 64
        %s112 = scalar_lea.vmem [#allocation2], %s111
        %s113 = smul.u32 2, %s15
        %p114 = scmp.lt.s32.totalorder %s113, 7
        %s115 = scalar_select %p114, %s113, 7
        %s116 = smul.addr %s115, 8
        %s117 = smul.addr %s116, 8
        %s118 = scalar_lea.vmem %s0, %s117
        %s119 = smul.u32 2, %s15
        %s120 = smul.u32 2, %s15
        %v121 = vld [vmem:[%s118] sm:$0xff]
        %v122 = vld [vmem:[%s118 + $0x8] sm:$0xff]
        %v123 = vld [vmem:[%s118 + $0x10] sm:$0xff]
        %v124 = vld [vmem:[%s118 + $0x18] sm:$0xff]
        %v125 = vld [vmem:[%s118 + $0x20] sm:$0xff]
        %v126 = vld [vmem:[%s118 + $0x28] sm:$0xff]
        %v127 = vld [vmem:[%s118 + $0x30] sm:$0xff]
        %v128 = vld [vmem:[%s118 + $0x38] sm:$0xff]
        %v129 = vld [vmem:[%s118 + $0x40] sm:$0xff]
        %v130 = vld [vmem:[%s118 + $0x48] sm:$0xff]
        %v131 = vld [vmem:[%s118 + $0x50] sm:$0xff]
        %v132 = vld [vmem:[%s118 + $0x58] sm:$0xff]
        %v133 = vld [vmem:[%s118 + $0x60] sm:$0xff]
        %v134 = vld [vmem:[%s118 + $0x68] sm:$0xff]
        %v135 = vld [vmem:[%s118 + $0x70] sm:$0xff]
        %v136 = vld [vmem:[%s118 + $0x78] sm:$0xff]
        %137 = vxpose.xlu0.b32.start [1/16] %v121, 128
        %138 = vxpose.xlu0.b32.cont [2/16] %v122, 128
        %139 = vxpose.xlu0.b32.cont [3/16] %v123, 128
        %140 = vxpose.xlu0.b32.cont [4/16] %v124, 128
        %141 = vxpose.xlu0.b32.cont [5/16] %v125, 128
        %142 = vxpose.xlu0.b32.cont [6/16] %v126, 128
        %143 = vxpose.xlu0.b32.cont [7/16] %v127, 128
        %144 = vxpose.xlu0.b32.cont [8/16] %v128, 128
        %145 = vxpose.xlu0.b32.cont [9/16] 0.0, 128
        %146 = vxpose.xlu0.b32.cont [10/16] 0.0, 128
        %147 = vxpose.xlu0.b32.cont [11/16] 0.0, 128
        %148 = vxpose.xlu0.b32.cont [12/16] 0.0, 128
        %149 = vxpose.xlu0.b32.cont [13/16] 0.0, 128
        %150 = vxpose.xlu0.b32.cont [14/16] 0.0, 128
        %151 = vxpose.xlu0.b32.cont [15/16] 0.0, 128
        %152 = vxpose.xlu0.b32.end [16/16] 0.0, 128
        %v153 = vpop.trf.xlu0
        %v154 = vpop.trf.xlu0
        %v155 = vpop.trf.xlu0
        %v156 = vpop.trf.xlu0
        %v157 = vpop.trf.xlu0
        %v158 = vpop.trf.xlu0
        %v159 = vpop.trf.xlu0
        %v160 = vpop.trf.xlu0
        %v161 = vpop.trf.xlu0
        %v162 = vpop.trf.xlu0
        %v163 = vpop.trf.xlu0
        %v164 = vpop.trf.xlu0
        %v165 = vpop.trf.xlu0
        %v166 = vpop.trf.xlu0
        %v167 = vpop.trf.xlu0
        %v168 = vpop.trf.xlu0
        %169 = vxpose.xlu0.b32.start [1/16] %v129, 128
        %170 = vxpose.xlu0.b32.cont [2/16] %v130, 128
        %171 = vxpose.xlu0.b32.cont [3/16] %v131, 128
        %172 = vxpose.xlu0.b32.cont [4/16] %v132, 128
        %173 = vxpose.xlu0.b32.cont [5/16] %v133, 128
        %174 = vxpose.xlu0.b32.cont [6/16] %v134, 128
        %175 = vxpose.xlu0.b32.cont [7/16] %v135, 128
        %176 = vxpose.xlu0.b32.cont [8/16] %v136, 128
        %177 = vxpose.xlu0.b32.cont [9/16] 0.0, 128
        %178 = vxpose.xlu0.b32.cont [10/16] 0.0, 128
        %179 = vxpose.xlu0.b32.cont [11/16] 0.0, 128
        %180 = vxpose.xlu0.b32.cont [12/16] 0.0, 128
        %181 = vxpose.xlu0.b32.cont [13/16] 0.0, 128
        %182 = vxpose.xlu0.b32.cont [14/16] 0.0, 128
        %183 = vxpose.xlu0.b32.cont [15/16] 0.0, 128
        %184 = vxpose.xlu0.b32.end [16/16] 0.0, 128
        %v185 = vpop.trf.xlu0
        %v186 = vpop.trf.xlu0
        %v187 = vpop.trf.xlu0
        %v188 = vpop.trf.xlu0
        %v189 = vpop.trf.xlu0
        %v190 = vpop.trf.xlu0
        %v191 = vpop.trf.xlu0
        %v192 = vpop.trf.xlu0
        %v193 = vpop.trf.xlu0
        %v194 = vpop.trf.xlu0
        %v195 = vpop.trf.xlu0
        %v196 = vpop.trf.xlu0
        %v197 = vpop.trf.xlu0
        %v198 = vpop.trf.xlu0
        %v199 = vpop.trf.xlu0
        %v200 = vpop.trf.xlu0
        %vm201 = vcmask 523264
        %202 = vst.msk [vmem:[%s112] sm:$0xff] %vm201, %v153
        %203 = vst.msk [vmem:[%s112 + $0x8] sm:$0xff] %vm201, %v154
        %204 = vst.msk [vmem:[%s112 + $0x10] sm:$0xff] %vm201, %v155
        %205 = vst.msk [vmem:[%s112 + $0x18] sm:$0xff] %vm201, %v156
        %206 = vst.msk [vmem:[%s112 + $0x20] sm:$0xff] %vm201, %v185
        %207 = vst.msk [vmem:[%s112 + $0x28] sm:$0xff] %vm201, %v186
        %208 = vst.msk [vmem:[%s112 + $0x30] sm:$0xff] %vm201, %v187
        %209 = vst.msk [vmem:[%s112 + $0x38] sm:$0xff] %vm201, %v188
        %s210 = sand.u32 %s49, 1
        %s211 = scalar_lea.sflag [#allocation3], %s210
        %s212 = sand.u32 %s49, 1
        %s213 = smul.addr %s212, 64
        %s214 = scalar_lea.vmem [#allocation2], %s213
        // Predicated region
        $region25: #{tpu_custom_call.1} parent=23 // pred_check
          %p215 = pneg %p59
        $region26: #{tpu_custom_call.1} parent=23 // pred_check_branch
          %217 = sbr.rel (%p215) target = $region28
        $region27: #{tpu_custom_call.1} parent=23 // pred_region
          %s218 = smul.u32 2, %s15
          %220 = vsyncadd %s211, 0
          %s221 = smul.addr %s218, 4
          %s222 = smul.addr %s221, 8
          %s223 = scalar_lea.hbm %s1, %s222
          %s224 = sshll.u32 %s214, 4
          %s225 = int_to_ptr.vmem [resolvable:$true] %s224
          %s226 = sshll.u32 %s223, 4
          %s227 = int_to_ptr.hbm [resolvable:$true] %s226
          %232 = dma.vmem_to_hbm [thread:$0]  %s225, 1024, %s227, %s211, 128, 128, 8
        $region28: #{tpu_custom_call.1} parent=23 // pred_fallthru
          _
      $region24: #{tpu_custom_call.1} parent=5 // pred_fallthru
        _
      %p233 = scmp.le.s32.totalorder 2, %s10
      // Predicated region
      $region29: #{tpu_custom_call.1} parent=5 // pred_check
        %p234 = pneg %p233
      $region30: #{tpu_custom_call.1} parent=5 // pred_check_branch
        %236 = sbr.rel (%p234) target = $region32
      $region31: #{tpu_custom_call.1} parent=5 // pred_region
        %s237 = ssub.s32 %s10, 2
        // Predicated region
        $region33: #{tpu_custom_call.1} parent=31 // pred_check
          %p238 = pneg %p65
        $region34: #{tpu_custom_call.1} parent=31 // pred_check_branch
          %240 = sbr.rel (%p238) target = $region36
        $region35: #{tpu_custom_call.1} parent=31 // pred_region
          %s241 = sand.u32 %s50, 1
          %s242 = scalar_lea.sflag [#allocation3], %s241
          %s243 = sand.u32 %s50, 1
          %s244 = smul.addr %s243, 64
          %s245 = scalar_lea.vmem [#allocation2], %s244
          %247 = dma.done %s242, 1024
        $region36: #{tpu_custom_call.1} parent=31 // pred_fallthru
          _
      $region32: #{tpu_custom_call.1} parent=5 // pred_fallthru
        _
    $region6: #{tpu_custom_call.1} parent=1 // loop_footer
      %s14 = sadd.s32 1, %s10
    $region7: #{tpu_custom_call.1} parent=1 // loop_footer_branch
      %9 = sbr.rel target = $region3
    $region8: #{tpu_custom_call.1} parent=1 // loop_exit
      _
    %248 = vsyncpa [#allocation3], 1
    %s249 = scalar_lea.sflag [#allocation3], 1
    %250 = vsyncpa %s249, 1

</llo_original>
